<compile_context>
chip_gen: v7x
topology: tpu7x:2x2x1
jax: 0.10.0
libtpu: 0.0.40
codegen_flags: <defaults>
</compile_context>

<pallas_src>
import functools

import jax
import jax.numpy as jnp
from jax.experimental import pallas as pl
from jax.experimental.pallas import tpu as pltpu


def _round_up(x: int, m: int) -> int:
    return ((x + m - 1) // m) * m


def _mlp_kernel(x_ref, w1_ref, b1_ref, w2_ref, b2_ref, o_ref):
    cd = w1_ref.dtype
    # hidden = relu(x @ W1 + b1): MXU matmul, f32 accumulate, f32 epilogue.
    h = jnp.maximum(
        jnp.dot(x_ref[...].astype(cd), w1_ref[...],
                preferred_element_type=jnp.float32)
        + b1_ref[...],
        0.0,
    )
    # out = hidden @ W2 + b2
    o = (
        jnp.dot(h.astype(cd), w2_ref[...], preferred_element_type=jnp.float32)
        + b2_ref[...]
    )
    o_ref[...] = o.astype(o_ref.dtype)


def prepare_mlp_params(w1, b1, w2, b2, *, compute_dtype=jnp.bfloat16,
                       pad_out=False):
    """One-time parameter preparation (hoisted out of the per-call path).

    w1: (d0, d1), b1: (d1,), w2: (d1, d2), b2: (d2,)  -- (in, out) layout.
    Pads the hidden dim to a multiple of 128 (lane-dense MXU N/K) and, if
    pad_out=True, the output dim as well. Biases stay f32 (f32 VPU epilogue).
    """
    d0, d1 = w1.shape
    d2 = w2.shape[1]
    d1p = _round_up(d1, 128)
    d2p = _round_up(d2, 128) if pad_out else d2

    cd = compute_dtype
    w1p = jnp.zeros((d0, d1p), cd).at[:, :d1].set(w1.astype(cd))
    w2p = jnp.zeros((d1p, d2p), cd).at[:d1, :d2].set(w2.astype(cd))
    b1p = jnp.zeros((1, d1p), jnp.float32).at[0, :d1].set(b1.astype(jnp.float32))
    b2p = jnp.zeros((1, d2p), jnp.float32).at[0, :d2].set(b2.astype(jnp.float32))
    return {"w1": w1p, "b1": b1p, "w2": w2p, "b2": b2p, "out_dim": int(d2)}


@functools.partial(
    jax.jit, static_argnames=("tile_b", "out_dim", "single_buffer_weights"))
def _forward(x, w1, b1, w2, b2, *, tile_b, out_dim, single_buffer_weights):
    out_dtype = x.dtype
    B, d0 = x.shape
    d1p = w1.shape[1]
    d2p = w2.shape[1]

    # --- batch tile selection -------------------------------------------
    tile_b = max(8, _round_up(tile_b, 8))
    if B <= 8:
        tb = B                                   # block == full dim (legal)
    else:
        # Aim for >= ~4 grid steps so DMA/compute overlap and both v7x
        # TensorCores get work; keep the tile a multiple of 8.
        tb = min(tile_b, max(8, _round_up(pl.cdiv(B, 4), 8)))

    w_elem = jnp.dtype(w1.dtype).itemsize
    x_elem = jnp.dtype(x.dtype).itemsize
    o_elem = jnp.dtype(out_dtype).itemsize

    def vmem_bytes(t):
        w_bufs = 1 if single_buffer_weights else 2
        weights = w_bufs * ((d0 * d1p + d1p * d2p) * w_elem + (d1p + d2p) * 4)
        xio = 2 * t * d0 * x_elem + 2 * t * d2p * o_elem   # double-buffered x/out
        hidden = 2 * t * d1p * 4                           # f32 intermediate + temps
        return weights + xio + hidden

    # Conservative budget that also fits v7x's 64 MiB physical VMEM.
    VMEM_BUDGET = 48 * 1024 * 1024
    while tb > 8 and vmem_bytes(tb) > VMEM_BUDGET:
        tb = max(8, _round_up(tb // 2, 8))
    # TODO(synk): if the resident weights alone exceed the budget (very large
    # hidden dims), add a K/N-tiled accumulator path instead of full residency.

    grid = (pl.cdiv(B, tb),)

    def wspec(shape):
        # Constant index_map -> weights stay VMEM-resident; single-buffer them
        # (default double-buffering only doubles their footprint).
        if single_buffer_weights:
            return pl.BlockSpec(shape, lambda i: (0, 0),
                                pipeline_mode=pl.Buffered(1))
        return pl.BlockSpec(shape, lambda i: (0, 0))

    cost = pl.CostEstimate(
        flops=2 * B * (d0 * d1p + d1p * d2p),
        transcendentals=0,
        bytes_accessed=B * d0 * x_elem
        + (d0 * d1p + d1p * d2p) * w_elem + (d1p + d2p) * 4
        + B * d2p * o_elem,
    )

    vmem_limit = int(min(max(4 * vmem_bytes(tb), 32 * 1024 * 1024),
                         56 * 1024 * 1024))

    out = pl.pallas_call(
        _mlp_kernel,
        out_shape=jax.ShapeDtypeStruct((B, d2p), out_dtype),
        grid=grid,
        in_specs=[
            pl.BlockSpec((tb, d0), lambda i: (i, 0)),   # x: tiled over batch
            wspec((d0, d1p)),                           # W1: resident
            wspec((1, d1p)),                            # b1: resident
            wspec((d1p, d2p)),                          # W2: resident
            wspec((1, d2p)),                            # b2: resident
        ],
        out_specs=pl.BlockSpec((tb, d2p), lambda i: (i, 0)),
        compiler_params=pltpu.CompilerParams(
            dimension_semantics=("parallel",),
            vmem_limit_bytes=vmem_limit,
        ),
        cost_estimate=cost,
    )(x, w1, b1, w2, b2)

    if d2p != out_dim:
        out = out[:, :out_dim]
    return out


_SINGLE_BUFFER_WEIGHTS = True  # flipped to False if pl.Buffered(1) is rejected


def simple_mlp(x, params, *, tile_b=512):
    """Fused MLP forward: relu(x @ W1 + b1) @ W2 + b2.

    `params` comes from prepare_mlp_params (called once, not per forward).
    """
    global _SINGLE_BUFFER_WEIGHTS
    if x.ndim == 1:
        # TODO(synk): like the PyTorch module, this views (N,) -> (N, 1), which
        # only matmuls correctly when dims[0] == 1.
        x = x.reshape(x.shape[0], -1)

    args = (x, params["w1"], params["b1"], params["w2"], params["b2"])
    kw = dict(tile_b=tile_b, out_dim=params["out_dim"])
    if _SINGLE_BUFFER_WEIGHTS:
        try:
            return _forward(*args, single_buffer_weights=True, **kw)
        except Exception:
            # This jax/libtpu build rejects pipeline_mode=pl.Buffered(1);
            # fall back to default (double-buffered) weight residency.
            _SINGLE_BUFFER_WEIGHTS = False
    return _forward(*args, single_buffer_weights=False, **kw)


def _ref_mlp(x, w1, b1, w2, b2):
    if x.ndim == 1:
        x = x.reshape(x.shape[0], -1)
    h = jnp.maximum(x @ w1 + b1, 0.0)
    return h @ w2 + b2


if __name__ == "__main__":
    # simple_MLP(dims=[32, 64, 16]); small batch plus a larger non-aligned
    # batch to exercise the ragged batch-tiled path.
    dims = (32, 64, 16)

    key = jax.random.PRNGKey(0)
    kx, k1, kb1, k2, kb2, kx2 = jax.random.split(key, 6)

    # PyTorch Linear stores W as (out, in); generate that way, transpose to
    # (in, out) for the kernel.
    bound1 = 1.0 / jnp.sqrt(dims[0])
    w1_torch = jax.random.uniform(k1, (dims[1], dims[0]), jnp.float32, -bound1, bound1)
    b1 = jax.random.uniform(kb1, (dims[1],), jnp.float32, -bound1, bound1)
    bound2 = 1.0 / jnp.sqrt(dims[1])
    w2_torch = jax.random.uniform(k2, (dims[2], dims[1]), jnp.float32, -bound2, bound2)
    b2 = jax.random.uniform(kb2, (dims[2],), jnp.float32, -bound2, bound2)
    w1 = w1_torch.T  # (d0, d1)
    w2 = w2_torch.T  # (d1, d2)

    x_small = jax.random.normal(kx, (8, dims[0]), dtype=jnp.float32)
    x_big = jax.random.normal(kx2, (1000, dims[0]), dtype=jnp.float32)
    ref_small = _ref_mlp(x_small, w1, b1, w2, b2)
    ref_big = _ref_mlp(x_big, w1, b1, w2, b2)

    # --- exact f32 path (params prepared once, outside the per-call path) ---
    params_f32 = prepare_mlp_params(w1, b1, w2, b2, compute_dtype=jnp.float32)

    out_small = jax.block_until_ready(simple_mlp(x_small, params_f32))
    assert out_small.shape == (8, dims[2])
    assert jnp.allclose(out_small, ref_small, atol=1e-5, rtol=1e-5), \
        "mismatch vs reference (small batch, f32)"

    out_big = jax.block_until_ready(simple_mlp(x_big, params_f32, tile_b=256))
    assert out_big.shape == (1000, dims[2])
    assert jnp.allclose(out_big, ref_big, atol=1e-4, rtol=1e-4), \
        "mismatch vs reference (large batch, f32, ragged tiles)"

    # --- lane-dense padded-output variant (pick per generation/shape) ---
    params_pad = prepare_mlp_params(w1, b1, w2, b2, compute_dtype=jnp.float32,
                                    pad_out=True)
    out_pad = jax.block_until_ready(simple_mlp(x_big, params_pad, tile_b=256))
    assert out_pad.shape == (1000, dims[2])
    assert jnp.allclose(out_pad, ref_big, atol=1e-4, rtol=1e-4), \
        "mismatch vs reference (padded-output variant)"

    # --- default bf16-operand path (f32 accumulate/epilogue) ---
    params_bf16 = prepare_mlp_params(w1, b1, w2, b2)  # compute_dtype=bfloat16
    out_bf16 = jax.block_until_ready(simple_mlp(x_big, params_bf16, tile_b=256))
    assert out_bf16.shape == (1000, dims[2])
    assert jnp.allclose(out_bf16, ref_big, atol=5e-2, rtol=5e-2), \
        "mismatch vs reference (bf16 operands)"

    print("KERNEL_OK")
</pallas_src>

<mosaic_0001>
module attributes {stable_mosaic.version = 11 : i64} {
  func.func @_mlp_kernel(%arg0: i32, %arg1: memref<8x32xf32, #tpu.memory_space<vmem>>, %arg2: memref<32x128xf32, #tpu.memory_space<vmem>>, %arg3: memref<1x128xf32, #tpu.memory_space<vmem>>, %arg4: memref<128x16xf32, #tpu.memory_space<vmem>>, %arg5: memref<1x16xf32, #tpu.memory_space<vmem>>, %arg6: memref<8x16xf32, #tpu.memory_space<vmem>>) attributes {dimension_semantics = [#tpu.dimension_semantics<parallel>], iteration_bounds = array<i64: 1>, scalar_prefetch = 0 : i64, scratch_operands = 0 : i64, tpu.core_type = #tpu.core_type<tc>, window_params = [{transform_indices = @transform_0, window_bounds = array<i64: 8, 32>}, {pipeline_mode = #tpu.pipeline_mode<synchronous>, transform_indices = @transform_1, window_bounds = array<i64: 32, 128>}, {pipeline_mode = #tpu.pipeline_mode<synchronous>, transform_indices = @transform_2, window_bounds = array<i64: 1, 128>}, {pipeline_mode = #tpu.pipeline_mode<synchronous>, transform_indices = @transform_3, window_bounds = array<i64: 128, 16>}, {pipeline_mode = #tpu.pipeline_mode<synchronous>, transform_indices = @transform_4, window_bounds = array<i64: 1, 16>}, {transform_indices = @transform_5, window_bounds = array<i64: 8, 16>}]} {
    %c0 = arith.constant 0 : index
    %c0_0 = arith.constant 0 : index
    %0 = vector.load %arg1[%c0, %c0_0] : memref<8x32xf32, #tpu.memory_space<vmem>>, vector<8x32xf32>
    %c0_1 = arith.constant 0 : index
    %c0_2 = arith.constant 0 : index
    %1 = vector.load %arg2[%c0_1, %c0_2] : memref<32x128xf32, #tpu.memory_space<vmem>>, vector<32x128xf32>
    %cst = arith.constant dense<0.000000e+00> : vector<8x128xf32>
    %2 = tpu.matmul %0, %1, %cst {dimension_numbers = #tpu.dot_dimension_numbers<[1], [0], [0], [1], [0, 0, 1, 1], [], []>} : vector<8x32xf32>, vector<32x128xf32>, vector<8x128xf32> -> vector<8x128xf32>
    %c0_3 = arith.constant 0 : index
    %c0_4 = arith.constant 0 : index
    %3 = vector.load %arg3[%c0_3, %c0_4] : memref<1x128xf32, #tpu.memory_space<vmem>>, vector<1x128xf32>
    %4 = vector.broadcast %3 : vector<1x128xf32> to vector<8x128xf32>
    %5 = arith.addf %2, %4 : vector<8x128xf32>
    %cst_5 = arith.constant 0.000000e+00 : f32
    %6 = vector.broadcast %cst_5 : f32 to vector<8x128xf32>
    %7 = arith.maximumf %5, %6 : vector<8x128xf32>
    %c0_6 = arith.constant 0 : index
    %c0_7 = arith.constant 0 : index
    %8 = vector.load %arg4[%c0_6, %c0_7] : memref<128x16xf32, #tpu.memory_space<vmem>>, vector<128x16xf32>
    %cst_8 = arith.constant dense<0.000000e+00> : vector<8x16xf32>
    %9 = tpu.matmul %7, %8, %cst_8 {dimension_numbers = #tpu.dot_dimension_numbers<[1], [0], [0], [1], [0, 0, 1, 1], [], []>} : vector<8x128xf32>, vector<128x16xf32>, vector<8x16xf32> -> vector<8x16xf32>
    %c0_9 = arith.constant 0 : index
    %c0_10 = arith.constant 0 : index
    %10 = vector.load %arg5[%c0_9, %c0_10] : memref<1x16xf32, #tpu.memory_space<vmem>>, vector<1x16xf32>
    %11 = vector.broadcast %10 : vector<1x16xf32> to vector<8x16xf32>
    %12 = arith.addf %9, %11 : vector<8x16xf32>
    %c0_11 = arith.constant 0 : index
    %c0_12 = arith.constant 0 : index
    %13 = vector.load %arg6[%c0_11, %c0_12] : memref<8x16xf32, #tpu.memory_space<vmem>>, vector<8x16xf32>
    tpu.vector_store %arg6[%c0_11, %c0_12], %12 {strides = array<i32>} : memref<8x16xf32, #tpu.memory_space<vmem>>, vector<8x16xf32>,
    return
  }
  func.func @transform_0(%arg0: i32) -> (i32, i32) {
    %c0_i32 = arith.constant 0 : i32
    %c0_i32_0 = arith.constant 0 : i32
    return %arg0, %c0_i32 : i32, i32
  }
  func.func @transform_1(%arg0: i32) -> (i32, i32) {
    %c0_i32 = arith.constant 0 : i32
    %c0_i32_0 = arith.constant 0 : i32
    %c0_i32_1 = arith.constant 0 : i32
    return %c0_i32, %c0_i32_0 : i32, i32
  }
  func.func @transform_2(%arg0: i32) -> (i32, i32) {
    %c0_i32 = arith.constant 0 : i32
    %c0_i32_0 = arith.constant 0 : i32
    %c0_i32_1 = arith.constant 0 : i32
    return %c0_i32, %c0_i32_0 : i32, i32
  }
  func.func @transform_3(%arg0: i32) -> (i32, i32) {
    %c0_i32 = arith.constant 0 : i32
    %c0_i32_0 = arith.constant 0 : i32
    %c0_i32_1 = arith.constant 0 : i32
    return %c0_i32, %c0_i32_0 : i32, i32
  }
  func.func @transform_4(%arg0: i32) -> (i32, i32) {
    %c0_i32 = arith.constant 0 : i32
    %c0_i32_0 = arith.constant 0 : i32
    %c0_i32_1 = arith.constant 0 : i32
    return %c0_i32, %c0_i32_0 : i32, i32
  }
  func.func @transform_5(%arg0: i32) -> (i32, i32) {
    %c0_i32 = arith.constant 0 : i32
    %c0_i32_0 = arith.constant 0 : i32
    return %arg0, %c0_i32 : i32, i32
  }
}

module attributes {stable_mosaic.version = 11 : i64} {
  func.func @_mlp_kernel(%arg0: i32, %arg1: memref<8x32xf32, #tpu.memory_space<vmem>>, %arg2: memref<32x128xf32, #tpu.memory_space<vmem>>, %arg3: memref<1x128xf32, #tpu.memory_space<vmem>>, %arg4: memref<128x16xf32, #tpu.memory_space<vmem>>, %arg5: memref<1x16xf32, #tpu.memory_space<vmem>>, %arg6: memref<8x16xf32, #tpu.memory_space<vmem>>) attributes {dimension_semantics = [#tpu.dimension_semantics<parallel>], iteration_bounds = array<i64: 1>, scalar_prefetch = 0 : i64, scratch_operands = 0 : i64, tpu.core_type = #tpu.core_type<tc>, window_params = [{transform_indices = @transform_0, window_bounds = array<i64: 8, 32>}, {pipeline_mode = #tpu.pipeline_mode<synchronous>, transform_indices = @transform_1, window_bounds = array<i64: 32, 128>}, {pipeline_mode = #tpu.pipeline_mode<synchronous>, transform_indices = @transform_2, window_bounds = array<i64: 1, 128>}, {pipeline_mode = #tpu.pipeline_mode<synchronous>, transform_indices = @transform_3, window_bounds = array<i64: 128, 16>}, {pipeline_mode = #tpu.pipeline_mode<synchronous>, transform_indices = @transform_4, window_bounds = array<i64: 1, 16>}, {transform_indices = @transform_5, window_bounds = array<i64: 8, 16>}]} {
    %c0 = arith.constant 0 : index
    %c0_0 = arith.constant 0 : index
    %0 = vector.load %arg1[%c0, %c0_0] : memref<8x32xf32, #tpu.memory_space<vmem>>, vector<8x32xf32>
    %c0_1 = arith.constant 0 : index
    %c0_2 = arith.constant 0 : index
    %1 = vector.load %arg2[%c0_1, %c0_2] : memref<32x128xf32, #tpu.memory_space<vmem>>, vector<32x128xf32>
    %cst = arith.constant dense<0.000000e+00> : vector<8x128xf32>
    %2 = tpu.matmul %0, %1, %cst {dimension_numbers = #tpu.dot_dimension_numbers<[1], [0], [0], [1], [0, 0, 1, 1], [], []>} : vector<8x32xf32>, vector<32x128xf32>, vector<8x128xf32> -> vector<8x128xf32>
    %c0_3 = arith.constant 0 : index
    %c0_4 = arith.constant 0 : index
    %3 = vector.load %arg3[%c0_3, %c0_4] : memref<1x128xf32, #tpu.memory_space<vmem>>, vector<1x128xf32>
    %4 = vector.broadcast %3 : vector<1x128xf32> to vector<8x128xf32>
    %5 = arith.addf %2, %4 : vector<8x128xf32>
    %cst_5 = arith.constant 0.000000e+00 : f32
    %6 = vector.broadcast %cst_5 : f32 to vector<8x128xf32>
    %7 = arith.maximumf %5, %6 : vector<8x128xf32>
    %c0_6 = arith.constant 0 : index
    %c0_7 = arith.constant 0 : index
    %8 = vector.load %arg4[%c0_6, %c0_7] : memref<128x16xf32, #tpu.memory_space<vmem>>, vector<128x16xf32>
    %cst_8 = arith.constant dense<0.000000e+00> : vector<8x16xf32>
    %9 = tpu.matmul %7, %8, %cst_8 {dimension_numbers = #tpu.dot_dimension_numbers<[1], [0], [0], [1], [0, 0, 1, 1], [], []>} : vector<8x128xf32>, vector<128x16xf32>, vector<8x16xf32> -> vector<8x16xf32>
    %c0_9 = arith.constant 0 : index
    %c0_10 = arith.constant 0 : index
    %10 = vector.load %arg5[%c0_9, %c0_10] : memref<1x16xf32, #tpu.memory_space<vmem>>, vector<1x16xf32>
    %11 = vector.broadcast %10 : vector<1x16xf32> to vector<8x16xf32>
    %12 = arith.addf %9, %11 : vector<8x16xf32>
    %c0_11 = arith.constant 0 : index
    %c0_12 = arith.constant 0 : index
    %13 = vector.load %arg6[%c0_11, %c0_12] : memref<8x16xf32, #tpu.memory_space<vmem>>, vector<8x16xf32>
    tpu.vector_store %arg6[%c0_11, %c0_12], %12 {strides = array<i32>} : memref<8x16xf32, #tpu.memory_space<vmem>>, vector<8x16xf32>,
    return
  }
  func.func @transform_0(%arg0: i32) -> (i32, i32) {
    %c0_i32 = arith.constant 0 : i32
    %c0_i32_0 = arith.constant 0 : i32
    return %arg0, %c0_i32 : i32, i32
  }
  func.func @transform_1(%arg0: i32) -> (i32, i32) {
    %c0_i32 = arith.constant 0 : i32
    %c0_i32_0 = arith.constant 0 : i32
    %c0_i32_1 = arith.constant 0 : i32
    return %c0_i32, %c0_i32_0 : i32, i32
  }
  func.func @transform_2(%arg0: i32) -> (i32, i32) {
    %c0_i32 = arith.constant 0 : i32
    %c0_i32_0 = arith.constant 0 : i32
    %c0_i32_1 = arith.constant 0 : i32
    return %c0_i32, %c0_i32_0 : i32, i32
  }
  func.func @transform_3(%arg0: i32) -> (i32, i32) {
    %c0_i32 = arith.constant 0 : i32
    %c0_i32_0 = arith.constant 0 : i32
    %c0_i32_1 = arith.constant 0 : i32
    return %c0_i32, %c0_i32_0 : i32, i32
  }
  func.func @transform_4(%arg0: i32) -> (i32, i32) {
    %c0_i32 = arith.constant 0 : i32
    %c0_i32_0 = arith.constant 0 : i32
    %c0_i32_1 = arith.constant 0 : i32
    return %c0_i32, %c0_i32_0 : i32, i32
  }
  func.func @transform_5(%arg0: i32) -> (i32, i32) {
    %c0_i32 = arith.constant 0 : i32
    %c0_i32_0 = arith.constant 0 : i32
    return %arg0, %c0_i32 : i32, i32
  }
}

</mosaic_0001>

<llo_original>
// kernel: _forward.1
$region0: #{_forward.1}
  #allocation0 [shape = 'u32[]', space=smem, size = 0x4, offset = 0x4, fixed_abs, tag = 'smem constant byte address 0x4 - core index']
  #allocation1 [shape = 'u32[144,128]{1,0:T(1,128)}', space=vmem, size = 0x12000, scoped, tag = 'internal scratch']
  %s0 = inlined_call_operand.vmem [shape: f32[8,32], index: 0, kind: input, shape index: {}]
  %s1 = inlined_call_operand.vmem [shape: f32[32,128], index: 1, kind: input, shape index: {}]
  %s2 = inlined_call_operand.vmem [shape: f32[1,128], index: 2, kind: input, shape index: {}]
  %s3 = inlined_call_operand.vmem [shape: f32[128,16], index: 3, kind: input, shape index: {}]
  %s4 = inlined_call_operand.vmem [shape: f32[1,16], index: 4, kind: input, shape index: {}]
  %s5 = inlined_call_operand.hbm [shape: f32[8,16], index: 5, kind: output, shape index: {}]
  %s6 = sld [smem:[#allocation0]]
  $region30: #{_forward.1} parent=0
    _
  %s8 = ssub.s32 1, %s6
  %s9 = scalar_select 0, %s8, %s6
  $region1: #{_forward.1} parent=0
    #allocation2 [shape = 'u8[4096]{0}', space=vmem, size = 0x1000, scoped, tag = 'output window, operand 0, single buffered']
    #allocation3 [shape = 's32[1]{0}', space=sflag, size = 0x4, scoped, tag = 'scoped memory for _forward.1']
    %10 = vsyncpa [#allocation3], 0
    // Predicated region
    $region2: #{_forward.1} parent=1 // pred_check
      _
    $region3: #{_forward.1} parent=1 // pred_check_branch
      %12 = sbr.rel (0) target = $region5
    $region4: #{_forward.1} parent=1 // pred_region
      _
    $region5: #{_forward.1} parent=1 // pred_fallthru
      _
    // Predicated region
    $region6: #{_forward.1} parent=1 // pred_check
      _
    $region7: #{_forward.1} parent=1 // pred_check_branch
      %14 = sbr.rel (0) target = $region9
    $region8: #{_forward.1} parent=1 // pred_region
      _
    $region9: #{_forward.1} parent=1 // pred_fallthru
      _
    // Predicated region
    $region10: #{_forward.1} parent=1 // pred_check
      _
    $region11: #{_forward.1} parent=1 // pred_check_branch
      %16 = sbr.rel (0) target = $region13
    $region12: #{_forward.1} parent=1 // pred_region
      _
    $region13: #{_forward.1} parent=1 // pred_fallthru
      _
    // Predicated region
    $region14: #{_forward.1} parent=1 // pred_check
      _
    $region15: #{_forward.1} parent=1 // pred_check_branch
      %18 = sbr.rel (0) target = $region17
    $region16: #{_forward.1} parent=1 // pred_region
      _
    $region17: #{_forward.1} parent=1 // pred_fallthru
      _
    // Predicated region
    $region18: #{_forward.1} parent=1 // pred_check
      _
    $region19: #{_forward.1} parent=1 // pred_check_branch
      %20 = sbr.rel (0) target = $region21
    $region20: #{_forward.1} parent=1 // pred_region
      _
    $region21: #{_forward.1} parent=1 // pred_fallthru
      _
    %v21 = vld [vmem:[%s0] sm:$0xff]
    %v22 = vld [vmem:[%s1] sm:$0xff]
    %v23 = vld [vmem:[%s1 + $0x8] sm:$0xff]
    %v24 = vld [vmem:[%s1 + $0x10] sm:$0xff]
    %v25 = vld [vmem:[%s1 + $0x18] sm:$0xff]
    %v26 = vld [vmem:[%s2] sm:$0x1]
    %v28 = vlaneseq
    %v29 = vshrl.u32 %v28, 7
    %v30 = vsub.s32 0, %v29
    %v31 = vrot.slane %v26, %v30
    %vm33 = vcmask 261120
    %v35 = vsel %vm33, %v21, 0
    %37 = vmatprep.subr.mxu0 0.0
    %38 = vmatpush1.msra.mxu0 %v22
    %39 = vmatprep.subr.mxu0 0.0
    %40 = vmatpush1.msra.mxu0 %v23
    %41 = vmatprep.subr.mxu0 0.0
    %42 = vmatpush1.msra.mxu0 %v24
    %43 = vmatprep.subr.mxu0 0.0
    %44 = vmatpush1.msra.mxu0 %v25
    %45 = vmatprep.subr.mxu0 0.0
    %46 = vmatpush1.msra.mxu0 0.0
    %47 = vmatprep.subr.mxu0 0.0
    %48 = vmatpush1.msra.mxu0 0.0
    %49 = vmatprep.subr.mxu0 0.0
    %50 = vmatpush1.msra.mxu0 0.0
    %51 = vmatprep.subr.mxu0 0.0
    %52 = vmatpush1.msra.mxu0 0.0
    %53 = vmatprep.subr.mxu0 0.0
    %54 = vmatpush1.msra.mxu0 0.0
    %55 = vmatprep.subr.mxu0 0.0
    %56 = vmatpush1.msra.mxu0 0.0
    %57 = vmatprep.subr.mxu0 0.0
    %58 = vmatpush1.msra.mxu0 0.0
    %59 = vmatprep.subr.mxu0 0.0
    %60 = vmatpush1.msra.mxu0 0.0
    %61 = vmatprep.subr.mxu0 0.0
    %62 = vmatpush1.msra.mxu0 0.0
    %63 = vmatprep.subr.mxu0 0.0
    %64 = vmatpush1.msra.mxu0 0.0
    %65 = vmatprep.subr.mxu0 0.0
    %66 = vmatpush1.msra.mxu0 0.0
    %67 = vmatprep.subr.mxu0 0.0
    %68 = vmatpush1.msra.mxu0 0.0
    %69 = vmatprep.subr.mxu0 0.0
    %70 = vmatpush1.msra.mxu0 0.0
    %71 = vmatprep.subr.mxu0 0.0
    %72 = vmatpush1.msra.mxu0 0.0
    %73 = vmatprep.subr.mxu0 0.0
    %74 = vmatpush1.msra.mxu0 0.0
    %75 = vmatprep.subr.mxu0 0.0
    %76 = vmatpush1.msra.mxu0 0.0
    %77 = vmatprep.subr.mxu0 0.0
    %78 = vmatpush1.msra.mxu0 0.0
    %79 = vmatprep.subr.mxu0 0.0
    %80 = vmatpush1.msra.mxu0 0.0
    %81 = vmatprep.subr.mxu0 0.0
    %82 = vmatpush1.msra.mxu0 0.0
    %83 = vmatprep.subr.mxu0 0.0
    %84 = vmatpush1.msra.mxu0 0.0
    %85 = vmatprep.subr.mxu0 0.0
    %86 = vmatpush1.msra.mxu0 0.0
    %87 = vmatprep.subr.mxu0 0.0
    %88 = vmatpush1.msra.mxu0 0.0
    %89 = vmatprep.subr.mxu0 0.0
    %90 = vmatpush1.msra.mxu0 0.0
    %91 = vmatprep.subr.mxu0 0.0
    %92 = vmatpush1.msra.mxu0 0.0
    %93 = vmatprep.subr.mxu0 0.0
    %94 = vmatpush1.msra.mxu0 0.0
    %95 = vmatprep.subr.mxu0 0.0
    %96 = vmatpush1.msra.mxu0 0.0
    %97 = vmatprep.subr.mxu0 0.0
    %98 = vmatpush1.msra.mxu0 0.0
    %99 = vmatprep.subr.mxu0 0.0
    %100 = vmatpush1.msra.mxu0 0.0
    %101 = vmatprep.mubr.f32.mxu0 0.0
    %102 = vmatmul.mubr.f32.gmra.mrb[0].mxu0 %v35
    %v103 = vpop.f32.mrb[0].mxu0
    %v104 = vadd.f32 %v31, %v103
    %v105 = vpop.f32.mrb[0].mxu0
    %106 = vdwg.mxu0
    %v107 = vmax.f32 %v104, 0.0
    %v108 = vld [vmem:[%s3] sm:$0xff]
    %v109 = vld [vmem:[%s3 + $0x8] sm:$0xff]
    %v110 = vld [vmem:[%s3 + $0x10] sm:$0xff]
    %v111 = vld [vmem:[%s3 + $0x18] sm:$0xff]
    %v112 = vld [vmem:[%s3 + $0x20] sm:$0xff]
    %v113 = vld [vmem:[%s3 + $0x28] sm:$0xff]
    %v114 = vld [vmem:[%s3 + $0x30] sm:$0xff]
    %v115 = vld [vmem:[%s3 + $0x38] sm:$0xff]
    %v116 = vld [vmem:[%s3 + $0x40] sm:$0xff]
    %v117 = vld [vmem:[%s3 + $0x48] sm:$0xff]
    %v118 = vld [vmem:[%s3 + $0x50] sm:$0xff]
    %v119 = vld [vmem:[%s3 + $0x58] sm:$0xff]
    %v120 = vld [vmem:[%s3 + $0x60] sm:$0xff]
    %v121 = vld [vmem:[%s3 + $0x68] sm:$0xff]
    %v122 = vld [vmem:[%s3 + $0x70] sm:$0xff]
    %v123 = vld [vmem:[%s3 + $0x78] sm:$0xff]
    %v124 = vld [vmem:[%s4] sm:$0x1]
    %v126 = vlaneseq
    %v127 = vshrl.u32 %v126, 7
    %v128 = vsub.s32 0, %v127
    %v129 = vrot.slane %v124, %v128
    %131 = vmatprep.subr.mxu0 0.0
    %132 = vmatpush1.msra.mxu0 %v108
    %133 = vmatprep.subr.mxu0 0.0
    %134 = vmatpush1.msra.mxu0 %v109
    %135 = vmatprep.subr.mxu0 0.0
    %136 = vmatpush1.msra.mxu0 %v110
    %137 = vmatprep.subr.mxu0 0.0
    %138 = vmatpush1.msra.mxu0 %v111
    %139 = vmatprep.subr.mxu0 0.0
    %140 = vmatpush1.msra.mxu0 %v112
    %141 = vmatprep.subr.mxu0 0.0
    %142 = vmatpush1.msra.mxu0 %v113
    %143 = vmatprep.subr.mxu0 0.0
    %144 = vmatpush1.msra.mxu0 %v114
    %145 = vmatprep.subr.mxu0 0.0
    %146 = vmatpush1.msra.mxu0 %v115
    %147 = vmatprep.subr.mxu0 0.0
    %148 = vmatpush1.msra.mxu0 %v116
    %149 = vmatprep.subr.mxu0 0.0
    %150 = vmatpush1.msra.mxu0 %v117
    %151 = vmatprep.subr.mxu0 0.0
    %152 = vmatpush1.msra.mxu0 %v118
    %153 = vmatprep.subr.mxu0 0.0
    %154 = vmatpush1.msra.mxu0 %v119
    %155 = vmatprep.subr.mxu0 0.0
    %156 = vmatpush1.msra.mxu0 %v120
    %157 = vmatprep.subr.mxu0 0.0
    %158 = vmatpush1.msra.mxu0 %v121
    %159 = vmatprep.subr.mxu0 0.0
    %160 = vmatpush1.msra.mxu0 %v122
    %161 = vmatprep.subr.mxu0 0.0
    %162 = vmatpush1.msra.mxu0 %v123
    %163 = vmatprep.subr.mxu0 0.0
    %164 = vmatpush1.msra.mxu0 0.0
    %165 = vmatprep.subr.mxu0 0.0
    %166 = vmatpush1.msra.mxu0 0.0
    %167 = vmatprep.subr.mxu0 0.0
    %168 = vmatpush1.msra.mxu0 0.0
    %169 = vmatprep.subr.mxu0 0.0
    %170 = vmatpush1.msra.mxu0 0.0
    %171 = vmatprep.subr.mxu0 0.0
    %172 = vmatpush1.msra.mxu0 0.0
    %173 = vmatprep.subr.mxu0 0.0
    %174 = vmatpush1.msra.mxu0 0.0
    %175 = vmatprep.subr.mxu0 0.0
    %176 = vmatpush1.msra.mxu0 0.0
    %177 = vmatprep.subr.mxu0 0.0
    %178 = vmatpush1.msra.mxu0 0.0
    %179 = vmatprep.subr.mxu0 0.0
    %180 = vmatpush1.msra.mxu0 0.0
    %181 = vmatprep.subr.mxu0 0.0
    %182 = vmatpush1.msra.mxu0 0.0
    %183 = vmatprep.subr.mxu0 0.0
    %184 = vmatpush1.msra.mxu0 0.0
    %185 = vmatprep.subr.mxu0 0.0
    %186 = vmatpush1.msra.mxu0 0.0
    %187 = vmatprep.subr.mxu0 0.0
    %188 = vmatpush1.msra.mxu0 0.0
    %189 = vmatprep.subr.mxu0 0.0
    %190 = vmatpush1.msra.mxu0 0.0
    %191 = vmatprep.subr.mxu0 0.0
    %192 = vmatpush1.msra.mxu0 0.0
    %193 = vmatprep.subr.mxu0 0.0
    %194 = vmatpush1.msra.mxu0 0.0
    %195 = vmatprep.mubr.f32.mxu0 0.0
    %196 = vmatmul.mubr.f32.gmra.mrb[0].mxu0 %v107
    %v197 = vpop.f32.mrb[0].mxu0
    %v198 = vadd.f32 %v129, %v197
    %v199 = vpop.f32.mrb[0].mxu0
    %200 = vdwg.mxu0
    %vm201 = vcmask 130048
    %202 = vst.msk [vmem:[#allocation2] sm:$0xff] %vm201, %v198
    // Predicated region
    $region22: #{_forward.1} parent=1 // pred_check
      _
    $region23: #{_forward.1} parent=1 // pred_check_branch
      %204 = sbr.rel (0) target = $region25
    $region24: #{_forward.1} parent=1 // pred_region
      %s206 = ssub.s32 128, 128
      %207 = vsyncadd [#allocation3], %s206
      %s209 = sshll.u32 [#allocation2], 4
      %s210 = int_to_ptr.vmem [resolvable:$true] %s209
      %212 = dma.vmem_to_hbm [thread:$0]  %s210, 128, %s5, [#allocation3]
    $region25: #{_forward.1} parent=1 // pred_fallthru
      _
    // Predicated region
    $region26: #{_forward.1} parent=1 // pred_check
      _
    $region27: #{_forward.1} parent=1 // pred_check_branch
      %214 = sbr.rel (0) target = $region29
    $region28: #{_forward.1} parent=1 // pred_region
      %215 = dma.done [#allocation3], 128
    $region29: #{_forward.1} parent=1 // pred_fallthru
      _
    %216 = vsyncpa [#allocation3], 1

// kernel: _forward.1
$region0: #{_forward.1}
  #allocation0 [shape = 'u32[]', space=smem, size = 0x4, offset = 0x4, fixed_abs, tag = 'smem constant byte address 0x4 - core index']
  #allocation1 [shape = 'u32[144,128]{1,0:T(1,128)}', space=vmem, size = 0x12000, scoped, tag = 'internal scratch']
  %s0 = inlined_call_operand.vmem [shape: f32[8,32], index: 0, kind: input, shape index: {}]
  %s1 = inlined_call_operand.vmem [shape: f32[32,128], index: 1, kind: input, shape index: {}]
  %s2 = inlined_call_operand.vmem [shape: f32[1,128], index: 2, kind: input, shape index: {}]
  %s3 = inlined_call_operand.vmem [shape: f32[128,16], index: 3, kind: input, shape index: {}]
  %s4 = inlined_call_operand.vmem [shape: f32[1,16], index: 4, kind: input, shape index: {}]
  %s5 = inlined_call_operand.hbm [shape: f32[8,16], index: 5, kind: output, shape index: {}]
  %s6 = sld [smem:[#allocation0]]
  $region30: #{_forward.1} parent=0
    _
  %s8 = ssub.s32 1, %s6
  %s9 = scalar_select 0, %s8, %s6
  $region1: #{_forward.1} parent=0
    #allocation2 [shape = 'u8[4096]{0}', space=vmem, size = 0x1000, scoped, tag = 'output window, operand 0, single buffered']
    #allocation3 [shape = 's32[1]{0}', space=sflag, size = 0x4, scoped, tag = 'scoped memory for _forward.1']
    %10 = vsyncpa [#allocation3], 0
    // Predicated region
    $region2: #{_forward.1} parent=1 // pred_check
      _
    $region3: #{_forward.1} parent=1 // pred_check_branch
      %12 = sbr.rel (0) target = $region5
    $region4: #{_forward.1} parent=1 // pred_region
      _
    $region5: #{_forward.1} parent=1 // pred_fallthru
      _
    // Predicated region
    $region6: #{_forward.1} parent=1 // pred_check
      _
    $region7: #{_forward.1} parent=1 // pred_check_branch
      %14 = sbr.rel (0) target = $region9
    $region8: #{_forward.1} parent=1 // pred_region
      _
    $region9: #{_forward.1} parent=1 // pred_fallthru
      _
    // Predicated region
    $region10: #{_forward.1} parent=1 // pred_check
      _
    $region11: #{_forward.1} parent=1 // pred_check_branch
      %16 = sbr.rel (0) target = $region13
    $region12: #{_forward.1} parent=1 // pred_region
      _
    $region13: #{_forward.1} parent=1 // pred_fallthru
      _
    // Predicated region
    $region14: #{_forward.1} parent=1 // pred_check
      _
    $region15: #{_forward.1} parent=1 // pred_check_branch
      %18 = sbr.rel (0) target = $region17
    $region16: #{_forward.1} parent=1 // pred_region
      _
    $region17: #{_forward.1} parent=1 // pred_fallthru
      _
    // Predicated region
    $region18: #{_forward.1} parent=1 // pred_check
      _
    $region19: #{_forward.1} parent=1 // pred_check_branch
      %20 = sbr.rel (0) target = $region21
    $region20: #{_forward.1} parent=1 // pred_region
      _
    $region21: #{_forward.1} parent=1 // pred_fallthru
      _
    %v21 = vld [vmem:[%s0] sm:$0xff]
    %v22 = vld [vmem:[%s1] sm:$0xff]
    %v23 = vld [vmem:[%s1 + $0x8] sm:$0xff]
    %v24 = vld [vmem:[%s1 + $0x10] sm:$0xff]
    %v25 = vld [vmem:[%s1 + $0x18] sm:$0xff]
    %v26 = vld [vmem:[%s2] sm:$0x1]
    %v28 = vlaneseq
    %v29 = vshrl.u32 %v28, 7
    %v30 = vsub.s32 0, %v29
    %v31 = vrot.slane %v26, %v30
    %vm33 = vcmask 261120
    %v35 = vsel %vm33, %v21, 0
    %37 = vmatprep.subr.mxu0 0.0
    %38 = vmatpush1.msra.mxu0 %v22
    %39 = vmatprep.subr.mxu0 0.0
    %40 = vmatpush1.msra.mxu0 %v23
    %41 = vmatprep.subr.mxu0 0.0
    %42 = vmatpush1.msra.mxu0 %v24
    %43 = vmatprep.subr.mxu0 0.0
    %44 = vmatpush1.msra.mxu0 %v25
    %45 = vmatprep.subr.mxu0 0.0
    %46 = vmatpush1.msra.mxu0 0.0
    %47 = vmatprep.subr.mxu0 0.0
    %48 = vmatpush1.msra.mxu0 0.0
    %49 = vmatprep.subr.mxu0 0.0
    %50 = vmatpush1.msra.mxu0 0.0
    %51 = vmatprep.subr.mxu0 0.0
    %52 = vmatpush1.msra.mxu0 0.0
    %53 = vmatprep.subr.mxu0 0.0
    %54 = vmatpush1.msra.mxu0 0.0
    %55 = vmatprep.subr.mxu0 0.0
    %56 = vmatpush1.msra.mxu0 0.0
    %57 = vmatprep.subr.mxu0 0.0
    %58 = vmatpush1.msra.mxu0 0.0
    %59 = vmatprep.subr.mxu0 0.0
    %60 = vmatpush1.msra.mxu0 0.0
    %61 = vmatprep.subr.mxu0 0.0
    %62 = vmatpush1.msra.mxu0 0.0
    %63 = vmatprep.subr.mxu0 0.0
    %64 = vmatpush1.msra.mxu0 0.0
    %65 = vmatprep.subr.mxu0 0.0
    %66 = vmatpush1.msra.mxu0 0.0
    %67 = vmatprep.subr.mxu0 0.0
    %68 = vmatpush1.msra.mxu0 0.0
    %69 = vmatprep.subr.mxu0 0.0
    %70 = vmatpush1.msra.mxu0 0.0
    %71 = vmatprep.subr.mxu0 0.0
    %72 = vmatpush1.msra.mxu0 0.0
    %73 = vmatprep.subr.mxu0 0.0
    %74 = vmatpush1.msra.mxu0 0.0
    %75 = vmatprep.subr.mxu0 0.0
    %76 = vmatpush1.msra.mxu0 0.0
    %77 = vmatprep.subr.mxu0 0.0
    %78 = vmatpush1.msra.mxu0 0.0
    %79 = vmatprep.subr.mxu0 0.0
    %80 = vmatpush1.msra.mxu0 0.0
    %81 = vmatprep.subr.mxu0 0.0
    %82 = vmatpush1.msra.mxu0 0.0
    %83 = vmatprep.subr.mxu0 0.0
    %84 = vmatpush1.msra.mxu0 0.0
    %85 = vmatprep.subr.mxu0 0.0
    %86 = vmatpush1.msra.mxu0 0.0
    %87 = vmatprep.subr.mxu0 0.0
    %88 = vmatpush1.msra.mxu0 0.0
    %89 = vmatprep.subr.mxu0 0.0
    %90 = vmatpush1.msra.mxu0 0.0
    %91 = vmatprep.subr.mxu0 0.0
    %92 = vmatpush1.msra.mxu0 0.0
    %93 = vmatprep.subr.mxu0 0.0
    %94 = vmatpush1.msra.mxu0 0.0
    %95 = vmatprep.subr.mxu0 0.0
    %96 = vmatpush1.msra.mxu0 0.0
    %97 = vmatprep.subr.mxu0 0.0
    %98 = vmatpush1.msra.mxu0 0.0
    %99 = vmatprep.subr.mxu0 0.0
    %100 = vmatpush1.msra.mxu0 0.0
    %101 = vmatprep.mubr.f32.mxu0 0.0
    %102 = vmatmul.mubr.f32.gmra.mrb[0].mxu0 %v35
    %v103 = vpop.f32.mrb[0].mxu0
    %v104 = vadd.f32 %v31, %v103
    %v105 = vpop.f32.mrb[0].mxu0
    %106 = vdwg.mxu0
    %v107 = vmax.f32 %v104, 0.0
    %v108 = vld [vmem:[%s3] sm:$0xff]
    %v109 = vld [vmem:[%s3 + $0x8] sm:$0xff]
    %v110 = vld [vmem:[%s3 + $0x10] sm:$0xff]
    %v111 = vld [vmem:[%s3 + $0x18] sm:$0xff]
    %v112 = vld [vmem:[%s3 + $0x20] sm:$0xff]
    %v113 = vld [vmem:[%s3 + $0x28] sm:$0xff]
    %v114 = vld [vmem:[%s3 + $0x30] sm:$0xff]
    %v115 = vld [vmem:[%s3 + $0x38] sm:$0xff]
    %v116 = vld [vmem:[%s3 + $0x40] sm:$0xff]
    %v117 = vld [vmem:[%s3 + $0x48] sm:$0xff]
    %v118 = vld [vmem:[%s3 + $0x50] sm:$0xff]
    %v119 = vld [vmem:[%s3 + $0x58] sm:$0xff]
    %v120 = vld [vmem:[%s3 + $0x60] sm:$0xff]
    %v121 = vld [vmem:[%s3 + $0x68] sm:$0xff]
    %v122 = vld [vmem:[%s3 + $0x70] sm:$0xff]
    %v123 = vld [vmem:[%s3 + $0x78] sm:$0xff]
    %v124 = vld [vmem:[%s4] sm:$0x1]
    %v126 = vlaneseq
    %v127 = vshrl.u32 %v126, 7
    %v128 = vsub.s32 0, %v127
    %v129 = vrot.slane %v124, %v128
    %131 = vmatprep.subr.mxu0 0.0
    %132 = vmatpush1.msra.mxu0 %v108
    %133 = vmatprep.subr.mxu0 0.0
    %134 = vmatpush1.msra.mxu0 %v109
    %135 = vmatprep.subr.mxu0 0.0
    %136 = vmatpush1.msra.mxu0 %v110
    %137 = vmatprep.subr.mxu0 0.0
    %138 = vmatpush1.msra.mxu0 %v111
    %139 = vmatprep.subr.mxu0 0.0
    %140 = vmatpush1.msra.mxu0 %v112
    %141 = vmatprep.subr.mxu0 0.0
    %142 = vmatpush1.msra.mxu0 %v113
    %143 = vmatprep.subr.mxu0 0.0
    %144 = vmatpush1.msra.mxu0 %v114
    %145 = vmatprep.subr.mxu0 0.0
    %146 = vmatpush1.msra.mxu0 %v115
    %147 = vmatprep.subr.mxu0 0.0
    %148 = vmatpush1.msra.mxu0 %v116
    %149 = vmatprep.subr.mxu0 0.0
    %150 = vmatpush1.msra.mxu0 %v117
    %151 = vmatprep.subr.mxu0 0.0
    %152 = vmatpush1.msra.mxu0 %v118
    %153 = vmatprep.subr.mxu0 0.0
    %154 = vmatpush1.msra.mxu0 %v119
    %155 = vmatprep.subr.mxu0 0.0
    %156 = vmatpush1.msra.mxu0 %v120
    %157 = vmatprep.subr.mxu0 0.0
    %158 = vmatpush1.msra.mxu0 %v121
    %159 = vmatprep.subr.mxu0 0.0
    %160 = vmatpush1.msra.mxu0 %v122
    %161 = vmatprep.subr.mxu0 0.0
    %162 = vmatpush1.msra.mxu0 %v123
    %163 = vmatprep.subr.mxu0 0.0
    %164 = vmatpush1.msra.mxu0 0.0
    %165 = vmatprep.subr.mxu0 0.0
    %166 = vmatpush1.msra.mxu0 0.0
    %167 = vmatprep.subr.mxu0 0.0
    %168 = vmatpush1.msra.mxu0 0.0
    %169 = vmatprep.subr.mxu0 0.0
    %170 = vmatpush1.msra.mxu0 0.0
    %171 = vmatprep.subr.mxu0 0.0
    %172 = vmatpush1.msra.mxu0 0.0
    %173 = vmatprep.subr.mxu0 0.0
    %174 = vmatpush1.msra.mxu0 0.0
    %175 = vmatprep.subr.mxu0 0.0
    %176 = vmatpush1.msra.mxu0 0.0
    %177 = vmatprep.subr.mxu0 0.0
    %178 = vmatpush1.msra.mxu0 0.0
    %179 = vmatprep.subr.mxu0 0.0
    %180 = vmatpush1.msra.mxu0 0.0
    %181 = vmatprep.subr.mxu0 0.0
    %182 = vmatpush1.msra.mxu0 0.0
    %183 = vmatprep.subr.mxu0 0.0
    %184 = vmatpush1.msra.mxu0 0.0
    %185 = vmatprep.subr.mxu0 0.0
    %186 = vmatpush1.msra.mxu0 0.0
    %187 = vmatprep.subr.mxu0 0.0
    %188 = vmatpush1.msra.mxu0 0.0
    %189 = vmatprep.subr.mxu0 0.0
    %190 = vmatpush1.msra.mxu0 0.0
    %191 = vmatprep.subr.mxu0 0.0
    %192 = vmatpush1.msra.mxu0 0.0
    %193 = vmatprep.subr.mxu0 0.0
    %194 = vmatpush1.msra.mxu0 0.0
    %195 = vmatprep.mubr.f32.mxu0 0.0
    %196 = vmatmul.mubr.f32.gmra.mrb[0].mxu0 %v107
    %v197 = vpop.f32.mrb[0].mxu0
    %v198 = vadd.f32 %v129, %v197
    %v199 = vpop.f32.mrb[0].mxu0
    %200 = vdwg.mxu0
    %vm201 = vcmask 130048
    %202 = vst.msk [vmem:[#allocation2] sm:$0xff] %vm201, %v198
    // Predicated region
    $region22: #{_forward.1} parent=1 // pred_check
      _
    $region23: #{_forward.1} parent=1 // pred_check_branch
      %204 = sbr.rel (0) target = $region25
    $region24: #{_forward.1} parent=1 // pred_region
      %s206 = ssub.s32 128, 128
      %207 = vsyncadd [#allocation3], %s206
      %s209 = sshll.u32 [#allocation2], 4
      %s210 = int_to_ptr.vmem [resolvable:$true] %s209
      %212 = dma.vmem_to_hbm [thread:$0]  %s210, 128, %s5, [#allocation3]
    $region25: #{_forward.1} parent=1 // pred_fallthru
      _
    // Predicated region
    $region26: #{_forward.1} parent=1 // pred_check
      _
    $region27: #{_forward.1} parent=1 // pred_check_branch
      %214 = sbr.rel (0) target = $region29
    $region28: #{_forward.1} parent=1 // pred_region
      %215 = dma.done [#allocation3], 128
    $region29: #{_forward.1} parent=1 // pred_fallthru
      _
    %216 = vsyncpa [#allocation3], 1

</llo_original>
